<compile_context>
chip_gen: v7x
topology: tpu7x:2x2x1
jax: 0.10.0
libtpu: 0.0.40
codegen_flags: <defaults>
</compile_context>

<pallas_src>
import functools

import jax
import jax.numpy as jnp
from jax.experimental import pallas as pl
from jax.experimental.pallas import tpu as pltpu

_EPS = 1e-6  # torch.nn.PairwiseDistance default eps (added elementwise before the norm)


def _round_up(x, m):
    return ((x + m - 1) // m) * m


def _as_positive_int(v):
    try:
        v = int(v)
    except (TypeError, ValueError):
        return None
    return v if v > 0 else None


def _tpu_info():
    try:
        return pltpu.get_tpu_info()
    except Exception:
        return None


def _vmem_capacity_bytes():
    info = _tpu_info()
    if info is not None:
        v = _as_positive_int(getattr(info, "vmem_capacity_bytes", None))
        if v is not None:
            return v
    return 64 * 1024 * 1024  # conservative floor: v7x per-TC VMEM


def _tensorcore_count():
    info = _tpu_info()
    if info is not None:
        for name in ("num_cores", "num_tensorcores", "tensorcores_per_chip",
                     "cores_per_chip", "core_count"):
            v = _as_positive_int(getattr(info, name, None))
            if v is not None:
                return v
    try:
        v = _as_positive_int(getattr(jax.devices()[0], "num_cores", None))
        if v is not None:
            return v
    except Exception:
        pass
    return 1


def _triplet_kernel(a_ref, p_ref, n_ref, gtp_ref, gtn_ref, out_ref, *,
                    margin, batch, tile_rows, num_tiles, tiles_per_core, ragged):
    if tiles_per_core is None:
        tile = pl.program_id(0)
    else:
        # Two-level (core, tile) grid: clamp redundant trailing steps onto the
        # last real tile -- an idempotent rewrite of identical values.
        tile = jnp.minimum(pl.program_id(0) * tiles_per_core + pl.program_id(1),
                           num_tiles - 1)

    # Upcast in-kernel so bf16/fp16 embeddings stream from HBM in native dtype.
    a = a_ref[...].astype(jnp.float32)
    p = p_ref[...].astype(jnp.float32)
    n = n_ref[...].astype(jnp.float32)
    gtp = gtp_ref[...]   # (TB, 1) float32
    gtn = gtn_ref[...]   # (TB, 1) float32

    # Raw sum of squares (more accurate than squaring the sqrt, fewer VALU ops).
    diff_ap = a - p + _EPS
    diff_an = a - n + _EPS
    sq_ap = jnp.sum(diff_ap * diff_ap, axis=-1, keepdims=True)   # (TB, 1)
    sq_an = jnp.sum(diff_an * diff_an, axis=-1, keepdims=True)   # (TB, 1)
    d_ap = jnp.sqrt(sq_ap)
    d_an = jnp.sqrt(sq_an)

    h_ap = jnp.maximum(margin - d_ap, 0.0)
    h_an = jnp.maximum(margin - d_an, 0.0)
    h2_ap = h_ap * h_ap
    h2_an = h_an * h_an

    # gt*0.5*sq + (1-gt)*0.5*h^2  ==  0.5*(h^2 + gt*(sq - h^2))
    loss = 0.5 * ((h2_ap + gtp * (sq_ap - h2_ap)) + (h2_an + gtn * (sq_an - h2_an)))

    if ragged:
        # Ragged last tile: rows past B read stale VMEM -- zero them explicitly
        # so no garbage/NaN can leak (their output writes are masked anyway).
        row = jax.lax.broadcasted_iota(jnp.int32, loss.shape, 0)
        loss = jnp.where(tile * tile_rows + row < batch, loss, 0.0)

    out_ref[...] = loss.astype(out_ref.dtype)


def triplet_contrastive_loss(anchor, positive, negative,
                             gt_anchor_positive, gt_anchor_negative,
                             margin=0.5, *, tile_rows=None,
                             vmem_limit_bytes=None, num_cores=None):
    """Per-sample TripletContrastiveLoss. Returns (B,) float32 (matches torch .squeeze())."""
    anchor = jnp.asarray(anchor)
    positive = jnp.asarray(positive)
    negative = jnp.asarray(negative)
    B, D = anchor.shape
    itemsize = jnp.dtype(anchor.dtype).itemsize

    # ---- generation-aware VMEM budget and batch-tile size ----
    vmem_cap = _vmem_capacity_bytes()
    if vmem_limit_bytes is None:
        vmem_limit_bytes = max(32 * 1024 * 1024, (vmem_cap * 7) // 8)
    vmem_limit_bytes = int(vmem_limit_bytes)

    if tile_rows is None:
        budget = (vmem_limit_bytes * 6) // 10          # ~60% of the scoped limit
        per_row = (3 * 2 * D * itemsize                # double-buffered a/p/n streams
                   + 4 * D * 4                         # in-kernel f32 upcast/diff intermediates
                   + 3 * 2 * 128 * 4)                  # lane-padded (TB,1) label/output buffers
        tile_rows = budget // max(per_row, 1)
    tb = max(8, (int(tile_rows) // 8) * 8)             # multiple of 8 sublanes
    tb = min(tb, 4096, _round_up(B, 8))                # amortize ~0.35us/step; don't exceed batch
    num_tiles = (B + tb - 1) // tb
    ragged = (B % tb) != 0

    # Labels -> (B, 1) float32 columns (tiny; no embedding padding anywhere).
    gtp = jnp.asarray(gt_anchor_positive, jnp.float32).reshape(B, 1)
    gtn = jnp.asarray(gt_anchor_negative, jnp.float32).reshape(B, 1)

    cost = pl.CostEstimate(
        flops=8 * B * D + 16 * B,
        transcendentals=2 * B,
        bytes_accessed=3 * B * D * itemsize + 3 * B * 4,
    )

    if num_cores is None:
        num_cores = _tensorcore_count()
    use_core_split = num_cores > 1 and num_tiles >= num_cores

    def build(tiles_per_core):
        if tiles_per_core is None:
            grid = (num_tiles,)
            semantics = ("parallel",)
            tile_of = lambda i: i
        else:
            grid = (num_cores, tiles_per_core)
            semantics = (pltpu.CORE_PARALLEL, pltpu.ARBITRARY)
            tile_of = lambda c, i: jnp.minimum(c * tiles_per_core + i, num_tiles - 1)

        emb_spec = pl.BlockSpec((tb, D), lambda *g: (tile_of(*g), 0))
        col_spec = pl.BlockSpec((tb, 1), lambda *g: (tile_of(*g), 0))
        kernel = functools.partial(
            _triplet_kernel, margin=float(margin), batch=B, tile_rows=tb,
            num_tiles=num_tiles, tiles_per_core=tiles_per_core, ragged=ragged)

        return pl.pallas_call(
            kernel,
            out_shape=jax.ShapeDtypeStruct((B, 1), jnp.float32),
            grid=grid,
            in_specs=[emb_spec, emb_spec, emb_spec, col_spec, col_spec],
            out_specs=col_spec,
            compiler_params=pltpu.CompilerParams(
                dimension_semantics=semantics,
                vmem_limit_bytes=vmem_limit_bytes),
            cost_estimate=cost,
        )

    if use_core_split:
        tiles_per_core = (num_tiles + num_cores - 1) // num_cores
        try:
            out = build(tiles_per_core)(anchor, positive, negative, gtp, gtn)
        except Exception:
            # Safety net: fall back to the single-axis grid if the core-split
            # variant fails to lower on this chip/runtime.
            out = build(None)(anchor, positive, negative, gtp, gtn)
    else:
        out = build(None)(anchor, positive, negative, gtp, gtn)

    return out[:, 0]


def _reference(anchor, positive, negative, gtp, gtn, margin=0.5):
    d_ap = jnp.sqrt(jnp.sum((anchor - positive + _EPS) ** 2, axis=-1))
    d_an = jnp.sqrt(jnp.sum((anchor - negative + _EPS) ** 2, axis=-1))
    pos = gtp * 0.5 * d_ap ** 2 + (1 - gtp) * 0.5 * jnp.maximum(margin - d_ap, 0.0) ** 2
    neg = gtn * 0.5 * d_an ** 2 + (1 - gtn) * 0.5 * jnp.maximum(margin - d_an, 0.0) ** 2
    return pos + neg


if __name__ == "__main__":
    key = jax.random.PRNGKey(0)
    k1, k2, k3, k4, k5 = jax.random.split(key, 5)

    # Small demo shapes: batch=8, embedding dim=32, float32 inputs (single full tile).
    B, D = 8, 32
    anchor = jax.random.normal(k1, (B, D), jnp.float32)
    positive = anchor + 0.1 * jax.random.normal(k2, (B, D), jnp.float32)
    negative = jax.random.normal(k3, (B, D), jnp.float32)
    gt_ap = jax.random.bernoulli(k4, 0.8, (B,)).astype(jnp.float32)
    gt_an = jax.random.bernoulli(k5, 0.2, (B,)).astype(jnp.float32)

    loss = triplet_contrastive_loss(anchor, positive, negative, gt_ap, gt_an, margin=0.5)
    loss = jax.block_until_ready(loss)
    ref = _reference(anchor, positive, negative, gt_ap, gt_an, margin=0.5)
    assert loss.shape == (B,)
    assert jnp.allclose(loss, ref, atol=1e-5, rtol=1e-5), (loss, ref)

    # Exercise the multi-tile grid + ragged (un-padded) last tile with bf16 embeddings.
    B2, D2 = 13, 32
    kk = jax.random.split(jax.random.PRNGKey(1), 5)
    a2 = jax.random.normal(kk[0], (B2, D2), jnp.float32)
    p2 = a2 + 0.1 * jax.random.normal(kk[1], (B2, D2), jnp.float32)
    n2 = jax.random.normal(kk[2], (B2, D2), jnp.float32)
    g1 = jax.random.bernoulli(kk[3], 0.5, (B2,)).astype(jnp.float32)
    g2 = jax.random.bernoulli(kk[4], 0.5, (B2,)).astype(jnp.float32)
    a2b, p2b, n2b = (x.astype(jnp.bfloat16) for x in (a2, p2, n2))

    loss2 = triplet_contrastive_loss(a2b, p2b, n2b, g1, g2, margin=0.5, tile_rows=8)
    loss2 = jax.block_until_ready(loss2)
    ref2 = _reference(a2b.astype(jnp.float32), p2b.astype(jnp.float32),
                      n2b.astype(jnp.float32), g1, g2, margin=0.5)
    assert loss2.shape == (B2,)
    assert jnp.allclose(loss2, ref2, atol=1e-4, rtol=1e-4), (loss2, ref2)

    print("KERNEL_OK")
</pallas_src>

<mosaic_0001>
module attributes {stable_mosaic.version = 11 : i64} {
  func.func @_triplet_kernel(%arg0: i32, %arg1: memref<8x32xf32, #tpu.memory_space<vmem>>, %arg2: memref<8x32xf32, #tpu.memory_space<vmem>>, %arg3: memref<8x32xf32, #tpu.memory_space<vmem>>, %arg4: memref<8x1xf32, #tpu.memory_space<vmem>>, %arg5: memref<8x1xf32, #tpu.memory_space<vmem>>, %arg6: memref<8x1xf32, #tpu.memory_space<vmem>>) attributes {dimension_semantics = [#tpu.dimension_semantics<parallel>], iteration_bounds = array<i64: 1>, scalar_prefetch = 0 : i64, scratch_operands = 0 : i64, tpu.core_type = #tpu.core_type<tc>, window_params = [{transform_indices = @transform_0, window_bounds = array<i64: 8, 32>}, {transform_indices = @transform_1, window_bounds = array<i64: 8, 32>}, {transform_indices = @transform_2, window_bounds = array<i64: 8, 32>}, {transform_indices = @transform_3, window_bounds = array<i64: 8, 1>}, {transform_indices = @transform_4, window_bounds = array<i64: 8, 1>}, {transform_indices = @transform_5, window_bounds = array<i64: 8, 1>}]} {
    %c0 = arith.constant 0 : index
    %c0_0 = arith.constant 0 : index
    %0 = vector.load %arg1[%c0, %c0_0] : memref<8x32xf32, #tpu.memory_space<vmem>>, vector<8x32xf32>
    %c0_1 = arith.constant 0 : index
    %c0_2 = arith.constant 0 : index
    %1 = vector.load %arg2[%c0_1, %c0_2] : memref<8x32xf32, #tpu.memory_space<vmem>>, vector<8x32xf32>
    %c0_3 = arith.constant 0 : index
    %c0_4 = arith.constant 0 : index
    %2 = vector.load %arg3[%c0_3, %c0_4] : memref<8x32xf32, #tpu.memory_space<vmem>>, vector<8x32xf32>
    %c0_5 = arith.constant 0 : index
    %c0_6 = arith.constant 0 : index
    %3 = vector.load %arg4[%c0_5, %c0_6] : memref<8x1xf32, #tpu.memory_space<vmem>>, vector<8x1xf32>
    %c0_7 = arith.constant 0 : index
    %c0_8 = arith.constant 0 : index
    %4 = vector.load %arg5[%c0_7, %c0_8] : memref<8x1xf32, #tpu.memory_space<vmem>>, vector<8x1xf32>
    %5 = arith.subf %0, %1 : vector<8x32xf32>
    %cst = arith.constant 9.99999997E-7 : f32
    %6 = vector.broadcast %cst : f32 to vector<8x32xf32>
    %7 = arith.addf %5, %6 : vector<8x32xf32>
    %8 = arith.subf %0, %2 : vector<8x32xf32>
    %cst_9 = arith.constant 9.99999997E-7 : f32
    %9 = vector.broadcast %cst_9 : f32 to vector<8x32xf32>
    %10 = arith.addf %8, %9 : vector<8x32xf32>
    %11 = arith.mulf %7, %7 : vector<8x32xf32>
    %cst_10 = arith.constant dense<0.000000e+00> : vector<8xf32>
    %12 = vector.multi_reduction <add>, %11, %cst_10 [1] : vector<8x32xf32> to vector<8xf32>
    %13 = vector.shape_cast %12 : vector<8xf32> to vector<8x1xf32>
    %14 = arith.mulf %10, %10 : vector<8x32xf32>
    %cst_11 = arith.constant dense<0.000000e+00> : vector<8xf32>
    %15 = vector.multi_reduction <add>, %14, %cst_11 [1] : vector<8x32xf32> to vector<8xf32>
    %16 = vector.shape_cast %15 : vector<8xf32> to vector<8x1xf32>
    %17 = math.sqrt %13 : vector<8x1xf32>
    %18 = math.sqrt %16 : vector<8x1xf32>
    %cst_12 = arith.constant 5.000000e-01 : f32
    %19 = vector.broadcast %cst_12 : f32 to vector<8x1xf32>
    %20 = arith.subf %19, %17 : vector<8x1xf32>
    %cst_13 = arith.constant 0.000000e+00 : f32
    %21 = vector.broadcast %cst_13 : f32 to vector<8x1xf32>
    %22 = arith.maximumf %20, %21 : vector<8x1xf32>
    %cst_14 = arith.constant 5.000000e-01 : f32
    %23 = vector.broadcast %cst_14 : f32 to vector<8x1xf32>
    %24 = arith.subf %23, %18 : vector<8x1xf32>
    %cst_15 = arith.constant 0.000000e+00 : f32
    %25 = vector.broadcast %cst_15 : f32 to vector<8x1xf32>
    %26 = arith.maximumf %24, %25 : vector<8x1xf32>
    %27 = arith.mulf %22, %22 : vector<8x1xf32>
    %28 = arith.mulf %26, %26 : vector<8x1xf32>
    %29 = arith.subf %13, %27 : vector<8x1xf32>
    %30 = arith.mulf %3, %29 : vector<8x1xf32>
    %31 = arith.addf %27, %30 : vector<8x1xf32>
    %32 = arith.subf %16, %28 : vector<8x1xf32>
    %33 = arith.mulf %4, %32 : vector<8x1xf32>
    %34 = arith.addf %28, %33 : vector<8x1xf32>
    %35 = arith.addf %31, %34 : vector<8x1xf32>
    %cst_16 = arith.constant 5.000000e-01 : f32
    %36 = vector.broadcast %cst_16 : f32 to vector<8x1xf32>
    %37 = arith.mulf %36, %35 : vector<8x1xf32>
    %c0_17 = arith.constant 0 : index
    %c0_18 = arith.constant 0 : index
    %38 = vector.load %arg6[%c0_17, %c0_18] : memref<8x1xf32, #tpu.memory_space<vmem>>, vector<8x1xf32>
    tpu.vector_store %arg6[%c0_17, %c0_18], %37 {strides = array<i32>} : memref<8x1xf32, #tpu.memory_space<vmem>>, vector<8x1xf32>,
    return
  }
  func.func @transform_0(%arg0: i32) -> (i32, i32) {
    %c0_i32 = arith.constant 0 : i32
    %c0_i32_0 = arith.constant 0 : i32
    return %arg0, %c0_i32 : i32, i32
  }
  func.func @transform_1(%arg0: i32) -> (i32, i32) {
    %c0_i32 = arith.constant 0 : i32
    %c0_i32_0 = arith.constant 0 : i32
    return %arg0, %c0_i32 : i32, i32
  }
  func.func @transform_2(%arg0: i32) -> (i32, i32) {
    %c0_i32 = arith.constant 0 : i32
    %c0_i32_0 = arith.constant 0 : i32
    return %arg0, %c0_i32 : i32, i32
  }
  func.func @transform_3(%arg0: i32) -> (i32, i32) {
    %c0_i32 = arith.constant 0 : i32
    %c0_i32_0 = arith.constant 0 : i32
    return %arg0, %c0_i32 : i32, i32
  }
  func.func @transform_4(%arg0: i32) -> (i32, i32) {
    %c0_i32 = arith.constant 0 : i32
    %c0_i32_0 = arith.constant 0 : i32
    return %arg0, %c0_i32 : i32, i32
  }
  func.func @transform_5(%arg0: i32) -> (i32, i32) {
    %c0_i32 = arith.constant 0 : i32
    %c0_i32_0 = arith.constant 0 : i32
    return %arg0, %c0_i32 : i32, i32
  }
}

</mosaic_0001>

<llo_original>
// kernel: tpu_custom_call.1
$region0: #{tpu_custom_call.1}
  #allocation0 [shape = 'u32[]', space=smem, size = 0x4, offset = 0x4, fixed_abs, tag = 'smem constant byte address 0x4 - core index']
  #allocation1 [shape = 'u32[144,128]{1,0:T(1,128)}', space=vmem, size = 0x12000, scoped, tag = 'internal scratch']
  %s0 = inlined_call_operand.vmem [shape: f32[8,32], index: 0, kind: input, shape index: {}]
  %s1 = inlined_call_operand.vmem [shape: f32[8,32], index: 1, kind: input, shape index: {}]
  %s2 = inlined_call_operand.vmem [shape: f32[8,32], index: 2, kind: input, shape index: {}]
  %s3 = inlined_call_operand.vmem [shape: f32[8,1], index: 3, kind: input, shape index: {}]
  %s4 = inlined_call_operand.vmem [shape: f32[8,1], index: 4, kind: input, shape index: {}]
  %s5 = inlined_call_operand.vmem [shape: f32[8,1], index: 5, kind: output, shape index: {}]
  %s6 = sld [smem:[#allocation0]]
  $region30: #{tpu_custom_call.1} parent=0
    _
  %s8 = ssub.s32 1, %s6
  %s9 = scalar_select 0, %s8, %s6
  // Predicated region
  $region2: #{tpu_custom_call.1} parent=0 // pred_check
    _
  $region3: #{tpu_custom_call.1} parent=0 // pred_check_branch
    %11 = sbr.rel (0) target = $region5
  $region4: #{tpu_custom_call.1} parent=0 // pred_region
    _
  $region5: #{tpu_custom_call.1} parent=0 // pred_fallthru
    _
  // Predicated region
  $region6: #{tpu_custom_call.1} parent=0 // pred_check
    _
  $region7: #{tpu_custom_call.1} parent=0 // pred_check_branch
    %13 = sbr.rel (0) target = $region9
  $region8: #{tpu_custom_call.1} parent=0 // pred_region
    _
  $region9: #{tpu_custom_call.1} parent=0 // pred_fallthru
    _
  // Predicated region
  $region10: #{tpu_custom_call.1} parent=0 // pred_check
    _
  $region11: #{tpu_custom_call.1} parent=0 // pred_check_branch
    %15 = sbr.rel (0) target = $region13
  $region12: #{tpu_custom_call.1} parent=0 // pred_region
    _
  $region13: #{tpu_custom_call.1} parent=0 // pred_fallthru
    _
  // Predicated region
  $region14: #{tpu_custom_call.1} parent=0 // pred_check
    _
  $region15: #{tpu_custom_call.1} parent=0 // pred_check_branch
    %17 = sbr.rel (0) target = $region17
  $region16: #{tpu_custom_call.1} parent=0 // pred_region
    _
  $region17: #{tpu_custom_call.1} parent=0 // pred_fallthru
    _
  // Predicated region
  $region18: #{tpu_custom_call.1} parent=0 // pred_check
    _
  $region19: #{tpu_custom_call.1} parent=0 // pred_check_branch
    %19 = sbr.rel (0) target = $region21
  $region20: #{tpu_custom_call.1} parent=0 // pred_region
    _
  $region21: #{tpu_custom_call.1} parent=0 // pred_fallthru
    _
  %v20 = vld [vmem:[%s0] sm:$0xff]
  %v21 = vld [vmem:[%s1] sm:$0xff]
  %v22 = vld [vmem:[%s2] sm:$0xff]
  %v23 = vld [vmem:[%s3] sm:$0xff]
  %v24 = vld [vmem:[%s4] sm:$0xff]
  %v25 = vsub.f32 %v20, %v21
  %v26 = vadd.f32 %v25, 1e-06
  %v27 = vsub.f32 %v20, %v22
  %v28 = vadd.f32 %v27, 1e-06
  %v29 = vmul.f32 %v26, %v26
  %vm30 = vcmask 261120
  %v31 = vsel %vm30, %v29, 0.0
  %32 = vadd.xlane.f32.xlu0 %v31
  %v33 = vpop.xlane.xlu0 %32
  %v34 = vmul.f32 %v28, %v28
  %v35 = vsel %vm30, %v34, 0.0
  %36 = vadd.xlane.f32.xlu0 %v35
  %v37 = vpop.xlane.xlu0 %36
  %v38 = vrsqrt.pop %v33
  %v39 = vmul.f32 %v33, %v38
  %vm40 = vcmp.eq.f32.partialorder %v33, inf
  %v41 = vsel %vm40, %v33, %v39
  %vm42 = vcmp.eq.f32.partialorder %v33, 0.0
  %v43 = vand.u32 %v33, 2147483648
  %v44 = vsel %vm42, %v43, %v41
  %v45 = vrsqrt.pop %v37
  %v46 = vmul.f32 %v37, %v45
  %vm47 = vcmp.eq.f32.partialorder %v37, inf
  %v48 = vsel %vm47, %v37, %v46
  %vm49 = vcmp.eq.f32.partialorder %v37, 0.0
  %v50 = vand.u32 %v37, 2147483648
  %v51 = vsel %vm49, %v50, %v48
  %v52 = vsub.f32 0.5, %v44
  %v53 = vmax.f32 %v52, 0.0
  %v54 = vsub.f32 0.5, %v51
  %v55 = vmax.f32 %v54, 0.0
  %v56 = vmul.f32 %v53, %v53
  %v57 = vmul.f32 %v55, %v55
  %v58 = vsub.f32 %v33, %v56
  %v59 = vmul.f32 %v23, %v58
  %v60 = vadd.f32 %v56, %v59
  %v61 = vsub.f32 %v37, %v57
  %v62 = vmul.f32 %v24, %v61
  %v63 = vadd.f32 %v57, %v62
  %v64 = vadd.f32 %v60, %v63
  %v65 = vmul.f32 %v64, 0.5
  %vm66 = vcmask 7168
  %67 = vst.msk [vmem:[%s5] sm:$0xff] %vm66, %v65
  // Predicated region
  $region22: #{tpu_custom_call.1} parent=0 // pred_check
    _
  $region23: #{tpu_custom_call.1} parent=0 // pred_check_branch
    %69 = sbr.rel (0) target = $region25
  $region24: #{tpu_custom_call.1} parent=0 // pred_region
    _
  $region25: #{tpu_custom_call.1} parent=0 // pred_fallthru
    _
  // Predicated region
  $region26: #{tpu_custom_call.1} parent=0 // pred_check
    _
  $region27: #{tpu_custom_call.1} parent=0 // pred_check_branch
    %71 = sbr.rel (0) target = $region29
  $region28: #{tpu_custom_call.1} parent=0 // pred_region
    _
  $region29: #{tpu_custom_call.1} parent=0 // pred_fallthru
    _

</llo_original>
